<compile_context>
chip_gen: v7x
topology: tpu7x:2x2x1
jax: 0.10.0
libtpu: 0.0.40
codegen_flags: <defaults>
</compile_context>

<pallas_src>
import functools
import math

import jax
import jax.numpy as jnp
from jax.experimental import pallas as pl
from jax.experimental.pallas import tpu as pltpu


# --------------------------- hardware-aware knobs ---------------------------

@functools.lru_cache(maxsize=None)
def _vmem_capacity_bytes():
    try:
        return int(pltpu.get_tpu_info().vmem_capacity_bytes)
    except Exception:
        return 64 * 1024 * 1024          # conservative: v7x per-TC size


@functools.lru_cache(maxsize=None)
def _vmem_limit_bytes():
    # ~65% of physical, capped at 64 MiB: ~42 MiB on v7x, 64 MiB on v5e/v6e.
    return min(int(_vmem_capacity_bytes() * 0.65), 64 * 1024 * 1024)


def _probe_kernel(x_ref, o_ref):
    o_ref[...] = x_ref[...] + 1.0


@functools.lru_cache(maxsize=None)
def _single_buffer_ok():
    """True iff this jax build accepts pipeline_mode=pl.Buffered(1) on TPU."""
    try:
        x = jnp.zeros((8, 128), jnp.float32)
        y = pl.pallas_call(
            _probe_kernel,
            out_shape=jax.ShapeDtypeStruct((8, 128), jnp.float32),
            grid=(2,),
            in_specs=[pl.BlockSpec((8, 128), lambda i: (0, 0),
                                   pipeline_mode=pl.Buffered(1))],
            out_specs=pl.BlockSpec((8, 128), lambda i: (0, 0)),
        )(x)
        jax.block_until_ready(y)
        return True
    except Exception:
        return False


def _const_spec(shape):
    """Spec for inputs whose block never changes across the grid (weights, LN
    params): single-buffered when supported -> halves resident-weight VMEM."""
    nd = len(shape)
    imap = lambda i, _nd=nd: (0,) * _nd
    if _single_buffer_ok():
        return pl.BlockSpec(shape, imap, pipeline_mode=pl.Buffered(1))
    return pl.BlockSpec(shape, imap)


def _full_spec(shape):
    nd = len(shape)
    return pl.BlockSpec(shape, lambda i, _nd=nd: (0,) * _nd)


def _pick_tv(vp):
    """Lane-dense vocab tile: bigger on v5e/v6e (128 MiB VMEM), smaller on v7x."""
    pref = 1024 if _vmem_capacity_bytes() >= (100 << 20) else 512
    tv = min(pref, vp)
    while vp % tv:
        tv //= 2
    return tv


# ----------------------------- in-kernel helpers -----------------------------

def _gelu(x):
    # tanh-approximation GELU (BERT-style), computed in f32
    return 0.5 * x * (1.0 + jnp.tanh(0.7978845608028654 * (x + 0.044715 * x * x * x)))


def _layernorm(x, gamma, beta, eps=1e-12):
    mu = jnp.mean(x, axis=-1, keepdims=True)
    var = jnp.mean((x - mu) ** 2, axis=-1, keepdims=True)
    return (x - mu) * jax.lax.rsqrt(var + eps) * gamma + beta


# ------------------------------- Pallas kernels -------------------------------

def qkv_kernel(e_ref, ge_ref, be_ref, wqkv_ref, bqkv_ref, x_ref, qkv_ref):
    """Embedding LayerNorm + fused Q/K/V projection (single (S,D)@(D,3D) matmul).

    1/sqrt(Dh) is folded into the Q third of wqkv/bqkv host-side."""
    e = e_ref[0]                                             # (S, D) f32
    x = _layernorm(e, ge_ref[...], be_ref[...])              # (S, D) f32
    x_ref[0] = x
    qkv = jnp.dot(x.astype(jnp.bfloat16), wqkv_ref[...],
                  preferred_element_type=jnp.float32) + bqkv_ref[...]
    qkv_ref[0] = qkv.astype(jnp.bfloat16)                    # (S, 3D) bf16


def attention_kernel(q_ref, k_ref, v_ref, mask_ref, ctx_ref):
    """Head-batched attention: H is a leading batch dim for both dot_generals."""
    # TODO(synk): at production S (>=512) tile queries/keys flash-style
    # (running max/sum/acc scratch) instead of materializing (H,S,S) scores.
    q = q_ref[0]                                             # (H, S, Dh) bf16
    k = k_ref[0]
    v = v_ref[0]
    s = jnp.einsum('hqd,hkd->hqk', q, k,
                   preferred_element_type=jnp.float32)       # (H, S, S) f32
    s = s + (1.0 - mask_ref[...]) * (-1e9)                   # (1,1,S) bias bcast
    s = s - jnp.max(s, axis=-1, keepdims=True)
    p = jnp.exp(s)
    p = p * pl.reciprocal(jnp.sum(p, axis=-1, keepdims=True), approx=True)
    ctx = jnp.einsum('hqk,hkd->hqd', p.astype(jnp.bfloat16), v,
                     preferred_element_type=jnp.float32)     # (H, S, Dh) f32
    ctx_ref[0] = ctx.astype(jnp.bfloat16)


def ffn_kernel(x_ref, ctx_ref, wo_ref, bo_ref, g1_ref, b1n_ref,
               w1_ref, b1_ref, w2_ref, b2_ref, g2_ref, b2n_ref, h_ref):
    """Output projection (one full-K matmul) + residual LN + FFN + LN."""
    x = x_ref[0]                                             # (S, D) f32
    attn = jnp.dot(ctx_ref[0], wo_ref[...],
                   preferred_element_type=jnp.float32) + bo_ref[...]
    h1 = _layernorm(x + attn, g1_ref[...], b1n_ref[...])
    ff = _gelu(jnp.dot(h1.astype(jnp.bfloat16), w1_ref[...],
                       preferred_element_type=jnp.float32) + b1_ref[...])
    ff = jnp.dot(ff.astype(jnp.bfloat16), w2_ref[...],
                 preferred_element_type=jnp.float32) + b2_ref[...]
    h_ref[0] = _layernorm(h1 + ff, g2_ref[...], b2n_ref[...]).astype(h_ref.dtype)


def pooler_clsf_kernel(h0_ref, wp_ref, bp_ref, ws_ref, bs_ref, out_ref):
    """pooled = tanh(h[:,0] @ Wp + bp);  logits = pooled @ Ws_pad + bs_pad."""
    pooled = jnp.tanh(
        jnp.dot(h0_ref[...].astype(jnp.bfloat16), wp_ref[...],
                preferred_element_type=jnp.float32) + bp_ref[...])
    out_ref[...] = (
        jnp.dot(pooled.astype(jnp.bfloat16), ws_ref[...],
                preferred_element_type=jnp.float32) + bs_ref[...])


def mlm_transform_kernel(hm_ref, wd_ref, bd_ref, gd_ref, bdn_ref, t_ref):
    """t = LayerNorm(gelu(h_masked @ Wd + bd)), stored once in bf16."""
    t = _gelu(jnp.dot(hm_ref[...].astype(jnp.bfloat16), wd_ref[...],
                      preferred_element_type=jnp.float32) + bd_ref[...])
    t_ref[...] = _layernorm(t, gd_ref[...], bdn_ref[...]).astype(jnp.bfloat16)


def mlm_logits_kernel(t_ref, emb_ref, obias_ref, out_ref):
    """logits tile = t @ emb_tile.T + bias_tile  (contract on D; emb is (tv, D))."""
    out_ref[...] = jax.lax.dot_general(
        t_ref[...], emb_ref[...], (((1,), (1,)), ((), ())),
        preferred_element_type=jnp.float32) + obias_ref[...]


# ------------------------------ pallas_call wrappers ------------------------------

def run_qkv(e, ge, be, wqkv, bqkv):
    B, S, D = e.shape
    D3 = wqkv.shape[1]
    return pl.pallas_call(
        qkv_kernel,
        out_shape=(jax.ShapeDtypeStruct((B, S, D), jnp.float32),
                   jax.ShapeDtypeStruct((B, S, D3), jnp.bfloat16)),
        grid=(B,),
        in_specs=[pl.BlockSpec((1, S, D), lambda b: (b, 0, 0)),
                  _const_spec((1, D)), _const_spec((1, D)),
                  _const_spec((D, D3)), _const_spec((1, D3))],
        out_specs=(pl.BlockSpec((1, S, D), lambda b: (b, 0, 0)),
                   pl.BlockSpec((1, S, D3), lambda b: (b, 0, 0))),
        compiler_params=pltpu.CompilerParams(
            dimension_semantics=("parallel",),
            vmem_limit_bytes=_vmem_limit_bytes()),
    )(e, ge, be, wqkv, bqkv)


def run_attention(q, k, v, mask_f):
    B, H, S, Dh = q.shape
    spec = pl.BlockSpec((1, H, S, Dh), lambda b: (b, 0, 0, 0))
    return pl.pallas_call(
        attention_kernel,
        out_shape=jax.ShapeDtypeStruct((B, H, S, Dh), jnp.bfloat16),
        grid=(B,),
        in_specs=[spec, spec, spec,
                  pl.BlockSpec((1, 1, S), lambda b: (b, 0, 0))],
        out_specs=spec,
        compiler_params=pltpu.CompilerParams(
            dimension_semantics=("parallel",),
            vmem_limit_bytes=_vmem_limit_bytes()),
    )(q, k, v, mask_f)


def run_ffn(x, ctx, enc):
    B, S, D = x.shape
    F = enc["w1"].shape[1]
    act_spec = pl.BlockSpec((1, S, D), lambda b: (b, 0, 0))
    return pl.pallas_call(
        ffn_kernel,
        out_shape=jax.ShapeDtypeStruct((B, S, D), jnp.bfloat16),
        grid=(B,),
        in_specs=[act_spec, act_spec,
                  _const_spec((D, D)), _const_spec((1, D)),
                  _const_spec((1, D)), _const_spec((1, D)),
                  _const_spec((D, F)), _const_spec((1, F)),
                  _const_spec((F, D)), _const_spec((1, D)),
                  _const_spec((1, D)), _const_spec((1, D))],
        out_specs=act_spec,
        compiler_params=pltpu.CompilerParams(
            dimension_semantics=("parallel",),
            vmem_limit_bytes=_vmem_limit_bytes()),
    )(x, ctx, enc["wo"], enc["bo"], enc["ln1_g"], enc["ln1_b"],
      enc["w1"], enc["b1"], enc["w2"], enc["b2"], enc["ln2_g"], enc["ln2_b"])


def run_pooler_clsf(h0, wp, bp, ws_p, bs_p):
    B, D = h0.shape
    Np = ws_p.shape[1]                   # 128-lane padded NSP logits width
    return pl.pallas_call(
        pooler_clsf_kernel,
        out_shape=jax.ShapeDtypeStruct((B, Np), jnp.float32),
        grid=(1,),
        in_specs=[_full_spec((B, D)), _full_spec((D, D)), _full_spec((1, D)),
                  _full_spec((D, Np)), _full_spec((1, Np))],
        out_specs=_full_spec((B, Np)),
        compiler_params=pltpu.CompilerParams(
            dimension_semantics=("arbitrary",),
            vmem_limit_bytes=_vmem_limit_bytes()),
    )(h0, wp, bp, ws_p, bs_p)


def run_mlm_transform(hm, wd, bd, gd, bdn):
    N, D = hm.shape
    return pl.pallas_call(
        mlm_transform_kernel,
        out_shape=jax.ShapeDtypeStruct((N, D), jnp.bfloat16),
        grid=(1,),
        in_specs=[_full_spec((N, D)), _full_spec((D, D)), _full_spec((1, D)),
                  _full_spec((1, D)), _full_spec((1, D))],
        out_specs=_full_spec((N, D)),
        compiler_params=pltpu.CompilerParams(
            dimension_semantics=("arbitrary",),
            vmem_limit_bytes=_vmem_limit_bytes()),
    )(hm, wd, bd, gd, bdn)


def run_mlm_logits(t, emb_p, obias_p, tv):
    N, D = t.shape
    Vp = emb_p.shape[0]
    return pl.pallas_call(
        mlm_logits_kernel,
        out_shape=jax.ShapeDtypeStruct((N, Vp), jnp.float32),
        grid=(Vp // tv,),
        in_specs=[_const_spec((N, D)),                       # shared transform t
                  pl.BlockSpec((tv, D), lambda v: (v, 0)),   # embedding row tile
                  pl.BlockSpec((1, tv), lambda v: (0, v))],  # output bias tile
        out_specs=pl.BlockSpec((N, tv), lambda v: (0, v)),
        compiler_params=pltpu.CompilerParams(
            dimension_semantics=("parallel",),               # v7x: vocab tiles on both TCs
            vmem_limit_bytes=_vmem_limit_bytes()),
    )(t, emb_p, obias_p)


# --------------------------------- forward glue ---------------------------------

def forward(params, input_ids, segment_ids=None, input_mask=None, masked_pos=None,
            num_heads=4):
    if segment_ids is None:
        segment_ids = jnp.zeros_like(input_ids)
    if input_mask is None:
        input_mask = jnp.ones_like(input_ids)

    B, S = input_ids.shape
    V, D = params["tok_embed"].shape
    H = num_heads
    Dh = D // H
    bf16 = jnp.bfloat16

    # ---- host-side weight packing (static; constant-folds under jit) ----
    scale = 1.0 / math.sqrt(Dh)
    wqkv = jnp.concatenate(
        [params["wq"] * scale, params["wk"], params["wv"]], axis=1).astype(bf16)
    bqkv = jnp.concatenate(
        [params["bq"] * scale, params["bk"], params["bv"]], axis=1)       # f32
    enc = {
        "wo": params["wo"].astype(bf16), "bo": params["bo"],
        "ln1_g": params["ln1_g"], "ln1_b": params["ln1_b"],
        "w1": params["w1"].astype(bf16), "b1": params["b1"],
        "w2": params["w2"].astype(bf16), "b2": params["b2"],
        "ln2_g": params["ln2_g"], "ln2_b": params["ln2_b"],
    }

    # embedding lookups (data-dependent gather -> plain JAX glue)
    e = (params["tok_embed"][input_ids]
         + params["pos_embed"][:S][None, :, :]
         + params["seg_embed"][segment_ids])
    mask_f = input_mask.astype(jnp.float32).reshape(B, 1, S)

    # -------- encoder layer: 3 Pallas kernels + XLA head-major relayout --------
    x, qkv = run_qkv(e, params["ln_e_g"], params["ln_e_b"], wqkv, bqkv)
    qkv_h = qkv.reshape(B, S, 3, H, Dh).transpose(0, 2, 3, 1, 4)   # (B,3,H,S,Dh) bf16
    ctx_h = run_attention(qkv_h[:, 0], qkv_h[:, 1], qkv_h[:, 2], mask_f)
    ctx = ctx_h.transpose(0, 2, 1, 3).reshape(B, S, D)             # (B,S,D) bf16
    h = run_ffn(x, ctx, enc)                                       # (B,S,D) bf16

    # -------- NSP head (output padded to 128 lanes, sliced back in glue) --------
    ws_p = jnp.pad(params["ws"], ((0, 0), (0, 128 - params["ws"].shape[1]))).astype(bf16)
    bs_p = jnp.pad(params["bs"], ((0, 0), (0, 128 - params["bs"].shape[1])))
    logits_clsf = run_pooler_clsf(h[:, 0], params["wp"].astype(bf16), params["bp"],
                                  ws_p, bs_p)[:, :2]

    # -------- MLM head --------
    M = masked_pos.shape[1]
    idx = jnp.broadcast_to(masked_pos[:, :, None].astype(jnp.int32), (B, M, D))
    h_masked = jnp.take_along_axis(h, idx, axis=1).reshape(B * M, D)

    # shared transform hoisted out of the vocab-tiled kernel, stored bf16 once
    t = run_mlm_transform(h_masked, params["wd"].astype(bf16), params["bd"],
                          params["ln_d_g"], params["ln_d_b"])

    # tied decoder weight used as (Vp, D): row-pad only, no per-step transpose;
    # the kernel contracts on D (t @ emb_tile.T).
    # TODO(synk): in a training loop keep the row-padded table as the stored
    # parameter so even the pad is not repeated per step.
    Vp = ((V + 127) // 128) * 128
    emb_p = jnp.pad(params["tok_embed"], ((0, Vp - V), (0, 0))).astype(bf16)
    obias_p = jnp.pad(params["out_bias"], ((0, 0), (0, Vp - V)))
    tv = _pick_tv(Vp)
    logits_lm = run_mlm_logits(t, emb_p, obias_p, tv)[:, :V].reshape(B, M, V)

    return logits_lm, logits_clsf


# --------------------------------- parameters ---------------------------------

def init_params(key, D, H, F, V, S, n_segments=2):
    ks = list(jax.random.split(key, 16))
    std = 0.02
    n = lambda k, shape: (std * jax.random.normal(k, shape, dtype=jnp.float32))
    tok_embed = n(ks[0], (V, D))
    p = {
        "tok_embed": tok_embed,
        "pos_embed": n(ks[1], (S, D)),
        "seg_embed": n(ks[2], (n_segments, D)),
        "ln_e_g": jnp.ones((1, D), jnp.float32), "ln_e_b": jnp.zeros((1, D), jnp.float32),
        # attention (weights stored (in, out) so kernel does x @ W)
        "wq": n(ks[3], (D, D)), "bq": jnp.zeros((1, D), jnp.float32),
        "wk": n(ks[4], (D, D)), "bk": jnp.zeros((1, D), jnp.float32),
        "wv": n(ks[5], (D, D)), "bv": jnp.zeros((1, D), jnp.float32),
        "wo": n(ks[6], (D, D)), "bo": jnp.zeros((1, D), jnp.float32),
        "ln1_g": jnp.ones((1, D), jnp.float32), "ln1_b": jnp.zeros((1, D), jnp.float32),
        # FFN
        "w1": n(ks[7], (D, F)), "b1": jnp.zeros((1, F), jnp.float32),
        "w2": n(ks[8], (F, D)), "b2": jnp.zeros((1, D), jnp.float32),
        "ln2_g": jnp.ones((1, D), jnp.float32), "ln2_b": jnp.zeros((1, D), jnp.float32),
        # pooler + seq_relationship
        "wp": n(ks[9], (D, D)), "bp": jnp.zeros((1, D), jnp.float32),
        "ws": n(ks[10], (D, 2)), "bs": jnp.zeros((1, 2), jnp.float32),
        # decoder (MLM) head; output weight tied to tok_embed at call time
        "wd": n(ks[11], (D, D)), "bd": jnp.zeros((1, D), jnp.float32),
        "ln_d_g": jnp.ones((1, D), jnp.float32), "ln_d_b": jnp.zeros((1, D), jnp.float32),
        "out_bias": jnp.zeros((1, V), jnp.float32),            # decoder_output_bias
    }
    return p


# ------------------------------------ main ------------------------------------

if __name__ == "__main__":
    B, S, D, H, F, V, M = 2, 8, 32, 4, 64, 64, 4

    params = init_params(jax.random.PRNGKey(0), D, H, F, V, S)

    k1, k2, k3 = jax.random.split(jax.random.PRNGKey(0), 3)
    input_ids = jax.random.randint(k1, (B, S), 0, V, dtype=jnp.int32)
    segment_ids = jax.random.randint(k2, (B, S), 0, 2, dtype=jnp.int32)
    input_mask = jnp.ones((B, S), dtype=jnp.int32)
    masked_pos = jax.random.randint(k3, (B, M), 0, S, dtype=jnp.int32)

    logits_lm, logits_clsf = forward(params, input_ids, segment_ids, input_mask,
                                     masked_pos, num_heads=H)
    jax.block_until_ready((logits_lm, logits_clsf))

    assert logits_lm.shape == (B, M, V)
    assert logits_clsf.shape == (B, 2)
    assert bool(jnp.all(jnp.isfinite(logits_lm))) and bool(jnp.all(jnp.isfinite(logits_clsf)))
    print("KERNEL_OK")
</pallas_src>

<mosaic_0001>
module attributes {stable_mosaic.version = 11 : i64} {
  func.func @_probe_kernel(%arg0: i32, %arg1: memref<8x128xf32, #tpu.memory_space<vmem>>, %arg2: memref<8x128xf32, #tpu.memory_space<vmem>>) attributes {dimension_semantics = [#tpu.dimension_semantics<arbitrary>], iteration_bounds = array<i64: 2>, scalar_prefetch = 0 : i64, scratch_operands = 0 : i64, tpu.core_type = #tpu.core_type<tc>, window_params = [{pipeline_mode = #tpu.pipeline_mode<synchronous>, transform_indices = @transform_0, window_bounds = array<i64: 8, 128>}, {pipeline_mode = #tpu.pipeline_mode<synchronous>, transform_indices = @transform_1, window_bounds = array<i64: 8, 128>}]} {
    %c0 = arith.constant 0 : index
    %c0_0 = arith.constant 0 : index
    %0 = vector.load %arg1[%c0, %c0_0] : memref<8x128xf32, #tpu.memory_space<vmem>>, vector<8x128xf32>
    %cst = arith.constant 1.000000e+00 : f32
    %1 = vector.broadcast %cst : f32 to vector<8x128xf32>
    %2 = arith.addf %0, %1 : vector<8x128xf32>
    %c0_1 = arith.constant 0 : index
    %c0_2 = arith.constant 0 : index
    %3 = vector.load %arg2[%c0_1, %c0_2] : memref<8x128xf32, #tpu.memory_space<vmem>>, vector<8x128xf32>
    tpu.vector_store %arg2[%c0_1, %c0_2], %2 {strides = array<i32>} : memref<8x128xf32, #tpu.memory_space<vmem>>, vector<8x128xf32>,
    return
  }
  func.func @transform_0(%arg0: i32) -> (i32, i32) {
    %c0_i32 = arith.constant 0 : i32
    %c0_i32_0 = arith.constant 0 : i32
    %c0_i32_1 = arith.constant 0 : i32
    return %c0_i32, %c0_i32_0 : i32, i32
  }
  func.func @transform_1(%arg0: i32) -> (i32, i32) {
    %c0_i32 = arith.constant 0 : i32
    %c0_i32_0 = arith.constant 0 : i32
    %c0_i32_1 = arith.constant 0 : i32
    return %c0_i32, %c0_i32_0 : i32, i32
  }
}

module attributes {stable_mosaic.version = 11 : i64} {
  func.func @qkv_kernel(%arg0: i32, %arg1: memref<1x8x32xf32, #tpu.memory_space<vmem>>, %arg2: memref<1x32xf32, #tpu.memory_space<vmem>>, %arg3: memref<1x32xf32, #tpu.memory_space<vmem>>, %arg4: memref<32x96xbf16, #tpu.memory_space<vmem>>, %arg5: memref<1x96xf32, #tpu.memory_space<vmem>>, %arg6: memref<1x8x32xf32, #tpu.memory_space<vmem>>, %arg7: memref<1x8x96xbf16, #tpu.memory_space<vmem>>) attributes {dimension_semantics = [#tpu.dimension_semantics<parallel>], iteration_bounds = array<i64: 2>, scalar_prefetch = 0 : i64, scratch_operands = 0 : i64, tpu.core_type = #tpu.core_type<tc>, window_params = [{transform_indices = @transform_0, window_bounds = array<i64: 1, 8, 32>}, {pipeline_mode = #tpu.pipeline_mode<synchronous>, transform_indices = @transform_1, window_bounds = array<i64: 1, 32>}, {pipeline_mode = #tpu.pipeline_mode<synchronous>, transform_indices = @transform_2, window_bounds = array<i64: 1, 32>}, {pipeline_mode = #tpu.pipeline_mode<synchronous>, transform_indices = @transform_3, window_bounds = array<i64: 32, 96>}, {pipeline_mode = #tpu.pipeline_mode<synchronous>, transform_indices = @transform_4, window_bounds = array<i64: 1, 96>}, {transform_indices = @transform_5, window_bounds = array<i64: 1, 8, 32>}, {transform_indices = @transform_6, window_bounds = array<i64: 1, 8, 96>}]} {
    %c0 = arith.constant 0 : index
    %c0_0 = arith.constant 0 : index
    %c0_1 = arith.constant 0 : index
    %0 = vector.load %arg1[%c0, %c0_0, %c0_1] : memref<1x8x32xf32, #tpu.memory_space<vmem>>, vector<1x8x32xf32>
    %1 = vector.shape_cast %0 : vector<1x8x32xf32> to vector<8x32xf32>
    %c0_2 = arith.constant 0 : index
    %c0_3 = arith.constant 0 : index
    %2 = vector.load %arg2[%c0_2, %c0_3] : memref<1x32xf32, #tpu.memory_space<vmem>>, vector<1x32xf32>
    %c0_4 = arith.constant 0 : index
    %c0_5 = arith.constant 0 : index
    %3 = vector.load %arg3[%c0_4, %c0_5] : memref<1x32xf32, #tpu.memory_space<vmem>>, vector<1x32xf32>
    %cst = arith.constant dense<0.000000e+00> : vector<8xf32>
    %4 = vector.multi_reduction <add>, %1, %cst [1] : vector<8x32xf32> to vector<8xf32>
    %5 = vector.shape_cast %4 : vector<8xf32> to vector<8x1xf32>
    %cst_6 = arith.constant 3.200000e+01 : f32
    %6 = vector.broadcast %cst_6 : f32 to vector<8x1xf32>
    %7 = arith.divf %5, %6 : vector<8x1xf32>
    %8 = vector.broadcast %7 : vector<8x1xf32> to vector<8x32xf32>
    %9 = arith.subf %1, %8 : vector<8x32xf32>
    %10 = arith.mulf %9, %9 : vector<8x32xf32>
    %cst_7 = arith.constant dense<0.000000e+00> : vector<8xf32>
    %11 = vector.multi_reduction <add>, %10, %cst_7 [1] : vector<8x32xf32> to vector<8xf32>
    %12 = vector.shape_cast %11 : vector<8xf32> to vector<8x1xf32>
    %cst_8 = arith.constant 3.200000e+01 : f32
    %13 = vector.broadcast %cst_8 : f32 to vector<8x1xf32>
    %14 = arith.divf %12, %13 : vector<8x1xf32>
    %15 = vector.broadcast %7 : vector<8x1xf32> to vector<8x32xf32>
    %16 = arith.subf %1, %15 : vector<8x32xf32>
    %cst_9 = arith.constant 9.99999996E-13 : f32
    %17 = vector.broadcast %cst_9 : f32 to vector<8x1xf32>
    %18 = arith.addf %14, %17 : vector<8x1xf32>
    %19 = math.rsqrt %18 : vector<8x1xf32>
    %20 = vector.broadcast %19 : vector<8x1xf32> to vector<8x32xf32>
    %21 = arith.mulf %16, %20 : vector<8x32xf32>
    %22 = vector.broadcast %2 : vector<1x32xf32> to vector<8x32xf32>
    %23 = arith.mulf %21, %22 : vector<8x32xf32>
    %24 = vector.broadcast %3 : vector<1x32xf32> to vector<8x32xf32>
    %25 = arith.addf %23, %24 : vector<8x32xf32>
    %c0_10 = arith.constant 0 : index
    %c0_11 = arith.constant 0 : index
    %c0_12 = arith.constant 0 : index
    %26 = vector.load %arg6[%c0_10, %c0_11, %c0_12] : memref<1x8x32xf32, #tpu.memory_space<vmem>>, vector<1x8x32xf32>
    %27 = vector.shape_cast %26 : vector<1x8x32xf32> to vector<8x32xf32>
    %28 = vector.shape_cast %25 : vector<8x32xf32> to vector<1x8x32xf32>
    tpu.vector_store %arg6[%c0_10, %c0_11, %c0_12], %28 {strides = array<i32>} : memref<1x8x32xf32, #tpu.memory_space<vmem>>, vector<1x8x32xf32>,
    %29 = arith.truncf %25 : vector<8x32xf32> to vector<8x32xbf16>
    %c0_13 = arith.constant 0 : index
    %c0_14 = arith.constant 0 : index
    %30 = vector.load %arg4[%c0_13, %c0_14] : memref<32x96xbf16, #tpu.memory_space<vmem>>, vector<32x96xbf16>
    %cst_15 = arith.constant dense<0.000000e+00> : vector<8x96xf32>
    %31 = tpu.matmul %29, %30, %cst_15 {dimension_numbers = #tpu.dot_dimension_numbers<[1], [0], [0], [1], [0, 0, 1, 1], [], []>} : vector<8x32xbf16>, vector<32x96xbf16>, vector<8x96xf32> -> vector<8x96xf32>
    %c0_16 = arith.constant 0 : index
    %c0_17 = arith.constant 0 : index
    %32 = vector.load %arg5[%c0_16, %c0_17] : memref<1x96xf32, #tpu.memory_space<vmem>>, vector<1x96xf32>
    %33 = vector.broadcast %32 : vector<1x96xf32> to vector<8x96xf32>
    %34 = arith.addf %31, %33 : vector<8x96xf32>
    %35 = arith.truncf %34 : vector<8x96xf32> to vector<8x96xbf16>
    %c0_18 = arith.constant 0 : index
    %c0_19 = arith.constant 0 : index
    %c0_20 = arith.constant 0 : index
    %36 = vector.load %arg7[%c0_18, %c0_19, %c0_20] : memref<1x8x96xbf16, #tpu.memory_space<vmem>>, vector<1x8x96xbf16>
    %37 = vector.shape_cast %36 : vector<1x8x96xbf16> to vector<8x96xbf16>
    %38 = vector.shape_cast %35 : vector<8x96xbf16> to vector<1x8x96xbf16>
    tpu.vector_store %arg7[%c0_18, %c0_19, %c0_20], %38 {strides = array<i32>} : memref<1x8x96xbf16, #tpu.memory_space<vmem>>, vector<1x8x96xbf16>,
    return
  }
  func.func @transform_0(%arg0: i32) -> (i32, i32, i32) {
    %c0_i32 = arith.constant 0 : i32
    %c0_i32_0 = arith.constant 0 : i32
    %c0_i32_1 = arith.constant 0 : i32
    return %arg0, %c0_i32, %c0_i32_0 : i32, i32, i32
  }
  func.func @transform_1(%arg0: i32) -> (i32, i32) {
    %c0_i32 = arith.constant 0 : i32
    %c0_i32_0 = arith.constant 0 : i32
    %c0_i32_1 = arith.constant 0 : i32
    return %c0_i32, %c0_i32_0 : i32, i32
  }
  func.func @transform_2(%arg0: i32) -> (i32, i32) {
    %c0_i32 = arith.constant 0 : i32
    %c0_i32_0 = arith.constant 0 : i32
    %c0_i32_1 = arith.constant 0 : i32
    return %c0_i32, %c0_i32_0 : i32, i32
  }
  func.func @transform_3(%arg0: i32) -> (i32, i32) {
    %c0_i32 = arith.constant 0 : i32
    %c0_i32_0 = arith.constant 0 : i32
    %c0_i32_1 = arith.constant 0 : i32
    return %c0_i32, %c0_i32_0 : i32, i32
  }
  func.func @transform_4(%arg0: i32) -> (i32, i32) {
    %c0_i32 = arith.constant 0 : i32
    %c0_i32_0 = arith.constant 0 : i32
    %c0_i32_1 = arith.constant 0 : i32
    return %c0_i32, %c0_i32_0 : i32, i32
  }
  func.func @transform_5(%arg0: i32) -> (i32, i32, i32) {
    %c0_i32 = arith.constant 0 : i32
    %c0_i32_0 = arith.constant 0 : i32
    %c0_i32_1 = arith.constant 0 : i32
    return %arg0, %c0_i32, %c0_i32_0 : i32, i32, i32
  }
  func.func @transform_6(%arg0: i32) -> (i32, i32, i32) {
    %c0_i32 = arith.constant 0 : i32
    %c0_i32_0 = arith.constant 0 : i32
    %c0_i32_1 = arith.constant 0 : i32
    return %arg0, %c0_i32, %c0_i32_0 : i32, i32, i32
  }
}

</mosaic_0001>

<llo_original>
// kernel: tpu_custom_call.1
$region0: #{tpu_custom_call.1}
  #allocation0 [shape = 'u32[]', space=smem, size = 0x4, offset = 0x4, fixed_abs, tag = 'smem constant byte address 0x4 - core index']
  #allocation1 [shape = 'u32[144,128]{1,0:T(1,128)}', space=vmem, size = 0x12000, scoped, tag = 'internal scratch']
  %s0 = inlined_call_operand.hbm [shape: f32[8,128], index: 0, kind: input, shape index: {}]
  %s1 = inlined_call_operand.hbm [shape: f32[8,128], index: 1, kind: output, shape index: {}]
  %s2 = sld [smem:[#allocation0]]
  $region41: #{tpu_custom_call.1} parent=0
    _
  %s4 = ssub.s32 1, %s2
  %s5 = scalar_select 0, %s4, %s2
  $region1: #{tpu_custom_call.1} parent=0
    #allocation2 [shape = 'u8[4096]{0}', space=vmem, size = 0x1000, scoped, tag = 'input window, operand 0, single buffered']
    #allocation3 [shape = 's32[2]{0}', space=sflag, size = 0x8, scoped, tag = 'scoped memory for tpu_custom_call.1']
    #allocation4 [shape = 's32[2]{0}', space=sflag, size = 0x8, scoped, tag = 'scoped memory for tpu_custom_call.1']
    #allocation5 [shape = 'u8[4096]{0}', space=vmem, size = 0x1000, scoped, tag = 'output window, operand 0, single buffered']
    %6 = vsyncpa [#allocation3], 0
    %7 = vsyncpa [#allocation4], 0
    loop: start=0, step=1, limit=4
    $region2: #{tpu_custom_call.1} parent=1 // loop_pre_header
      _
    $region3: #{tpu_custom_call.1} parent=1 // loop_header
      %s9 = sphi 0, %s13
      %p10 = scmp.ge.s32.totalorder %s9, 4
      %s17 = sphi 0, %s17
      %s19 = sphi 0, %s17
      %s20 = sphi 0, %s19
      %s34 = sphi 0, %s20
      %s38 = sphi 0, %s38
      %s40 = sphi 0, %s38
      %s41 = sphi 0, %s40
      %s55 = sphi 0, %s41
    $region4: #{tpu_custom_call.1} parent=1 // loop_header_branch
      %12 = sbr.rel (%p10) target = $region8
    $region5: #{tpu_custom_call.1} parent=1 // loop_body
      %s14 = ssub.s32 %s9, 1
      %s15 = ssub.s32 %s9, 2
      %s16 = sadd.s32 %s9, 1
      %s18 = sadd.s32 %s17, 1
      %p21 = scmp.eq.s32.totalorder %s9, 1
      %p22 = scmp.ne.s32.totalorder %s17, %s19
      %p23 = scmp.eq.s32.totalorder %s9, 0
      %p24 = por %p22, %p23
      %p25 = scmp.ne.s32.totalorder %s17, %s19
      %p26 = scmp.eq.s32.totalorder %s14, 1
      %p27 = por %p25, %p26
      %p28 = scmp.ne.s32.totalorder %s19, %s20
      %p29 = scmp.eq.s32.totalorder %s14, 0
      %p30 = por %p28, %p29
      %p31 = scmp.ne.s32.totalorder %s19, %s20
      %p32 = scmp.eq.s32.totalorder %s15, 1
      %p33 = por %p31, %p32
      %p35 = scmp.ne.s32.totalorder %s20, %s34
      %p36 = scmp.eq.s32.totalorder %s15, 0
      %p37 = por %p35, %p36
      %s39 = sadd.s32 %s38, 1
      %p42 = scmp.eq.s32.totalorder %s9, 1
      %p43 = scmp.ne.s32.totalorder %s38, %s40
      %p44 = scmp.eq.s32.totalorder %s9, 0
      %p45 = por %p43, %p44
      %p46 = scmp.ne.s32.totalorder %s38, %s40
      %p47 = scmp.eq.s32.totalorder %s14, 1
      %p48 = por %p46, %p47
      %p49 = scmp.ne.s32.totalorder %s40, %s41
      %p50 = scmp.eq.s32.totalorder %s14, 0
      %p51 = por %p49, %p50
      %p52 = scmp.ne.s32.totalorder %s40, %s41
      %p53 = scmp.eq.s32.totalorder %s15, 1
      %p54 = por %p52, %p53
      %p56 = scmp.ne.s32.totalorder %s41, %s55
      %p57 = scmp.eq.s32.totalorder %s15, 0
      %p58 = por %p56, %p57
      %p59 = scmp.le.s32.totalorder 1, %s9
      %p60 = scmp.lt.s32.totalorder %s9, 3
      %p61 = pnand %p59, %p60
      %p62 = pneg %p61
      // Predicated region
      $region9: #{tpu_custom_call.1} parent=5 // pred_check
        _
      $region10: #{tpu_custom_call.1} parent=5 // pred_check_branch
        %64 = sbr.rel (%p61) target = $region12
      $region11: #{tpu_custom_call.1} parent=5 // pred_region
        %s65 = ssub.s32 %s9, 1
        // Predicated region
        $region13: #{tpu_custom_call.1} parent=11 // pred_check
          %p66 = pneg %p30
        $region14: #{tpu_custom_call.1} parent=11 // pred_check_branch
          %68 = sbr.rel (%p66) target = $region16
        $region15: #{tpu_custom_call.1} parent=11 // pred_region
          %s70 = ssub.s32 128, 128
          %71 = vsyncadd [#allocation3], %s70
          %s73 = sshll.u32 [#allocation2], 4
          %s74 = int_to_ptr.vmem [resolvable:$true] %s73
          %76 = dma.hbm_to_vmem [thread:$0]  %s0, 128, %s74, [#allocation3]
        $region16: #{tpu_custom_call.1} parent=11 // pred_fallthru
          _
      $region12: #{tpu_custom_call.1} parent=5 // pred_fallthru
        _
      %p77 = scmp.lt.s32.totalorder %s9, 2
      // Predicated region
      $region17: #{tpu_custom_call.1} parent=5 // pred_check
        %p78 = pneg %p77
      $region18: #{tpu_custom_call.1} parent=5 // pred_check_branch
        %80 = sbr.rel (%p78) target = $region20
      $region19: #{tpu_custom_call.1} parent=5 // pred_region
        _
      $region20: #{tpu_custom_call.1} parent=5 // pred_fallthru
        _
      %p81 = scmp.le.s32.totalorder 1, %s9
      %p82 = scmp.lt.s32.totalorder %s9, 3
      %p83 = pnand %p81, %p82
      %p84 = pneg %p83
      // Predicated region
      $region21: #{tpu_custom_call.1} parent=5 // pred_check
        _
      $region22: #{tpu_custom_call.1} parent=5 // pred_check_branch
        %86 = sbr.rel (%p83) target = $region24
      $region23: #{tpu_custom_call.1} parent=5 // pred_region
        %s87 = ssub.s32 %s9, 1
        // Predicated region
        $region25: #{tpu_custom_call.1} parent=23 // pred_check
          %p88 = pneg %p30
        $region26: #{tpu_custom_call.1} parent=23 // pred_check_branch
          %90 = sbr.rel (%p88) target = $region28
        $region27: #{tpu_custom_call.1} parent=23 // pred_region
          %91 = dma.done [#allocation3], 128
        $region28: #{tpu_custom_call.1} parent=23 // pred_fallthru
          _
        %p92 = pneg %p30
        %p93 = pneg %p27
        %p94 = pneg %p51
        %p95 = pneg %p48
        %v96 = vld [vmem:[#allocation2] sm:$0xff]
        %v97 = vadd.f32 %v96, 1.0
        %98 = vst [vmem:[#allocation5] sm:$0xff] %v97
        // Predicated region
        $region29: #{tpu_custom_call.1} parent=23 // pred_check
          %p99 = pneg %p48
        $region30: #{tpu_custom_call.1} parent=23 // pred_check_branch
          %101 = sbr.rel (%p99) target = $region32
        $region31: #{tpu_custom_call.1} parent=23 // pred_region
          %s103 = ssub.s32 128, 128
          %104 = vsyncadd [#allocation4], %s103
          %s106 = sshll.u32 [#allocation5], 4
          %s107 = int_to_ptr.vmem [resolvable:$true] %s106
          %109 = dma.vmem_to_hbm [thread:$0]  %s107, 128, %s1, [#allocation4]
        $region32: #{tpu_custom_call.1} parent=23 // pred_fallthru
          _
        // Predicated region
        $region33: #{tpu_custom_call.1} parent=23 // pred_check
          %p110 = pneg %p48
        $region34: #{tpu_custom_call.1} parent=23 // pred_check_branch
          %112 = sbr.rel (%p110) target = $region36
        $region35: #{tpu_custom_call.1} parent=23 // pred_region
          %113 = dma.done [#allocation4], 128
        $region36: #{tpu_custom_call.1} parent=23 // pred_fallthru
          _
      $region24: #{tpu_custom_call.1} parent=5 // pred_fallthru
        _
      %p114 = scmp.le.s32.totalorder 2, %s9
      // Predicated region
      $region37: #{tpu_custom_call.1} parent=5 // pred_check
        %p115 = pneg %p114
      $region38: #{tpu_custom_call.1} parent=5 // pred_check_branch
        %117 = sbr.rel (%p115) target = $region40
      $region39: #{tpu_custom_call.1} parent=5 // pred_region
        %s118 = ssub.s32 %s9, 2
      $region40: #{tpu_custom_call.1} parent=5 // pred_fallthru
        _
    $region6: #{tpu_custom_call.1} parent=1 // loop_footer
      %s13 = sadd.s32 1, %s9
    $region7: #{tpu_custom_call.1} parent=1 // loop_footer_branch
      %8 = sbr.rel target = $region3
    $region8: #{tpu_custom_call.1} parent=1 // loop_exit
      _
    %119 = vsyncpa [#allocation3], 1
    %s120 = scalar_lea.sflag [#allocation3], 1
    %121 = vsyncpa %s120, 1
    %122 = vsyncpa [#allocation4], 1
    %s123 = scalar_lea.sflag [#allocation4], 1
    %124 = vsyncpa %s123, 1

// kernel: tpu_custom_call.1
$region0: #{tpu_custom_call.1}
  #allocation0 [shape = 'u32[]', space=smem, size = 0x4, offset = 0x4, fixed_abs, tag = 'smem constant byte address 0x4 - core index']
  #allocation1 [shape = 'u32[144,128]{1,0:T(1,128)}', space=vmem, size = 0x12000, scoped, tag = 'internal scratch']
  %s0 = inlined_call_operand.hbm [shape: f32[2,8,32], index: 0, kind: input, shape index: {}]
  %s1 = inlined_call_operand.vmem [shape: f32[1,32], index: 1, kind: input, shape index: {}]
  %s2 = inlined_call_operand.vmem [shape: f32[1,32], index: 2, kind: input, shape index: {}]
  %s3 = inlined_call_operand.hbm [shape: bf16[32,96], index: 3, kind: input, shape index: {}]
  %s4 = inlined_call_operand.vmem [shape: f32[1,96], index: 4, kind: input, shape index: {}]
  %s5 = inlined_call_operand.hbm [shape: f32[2,8,32], index: 5, kind: output, shape index: {0}]
  %s6 = inlined_call_operand.hbm [shape: bf16[2,8,96], index: 6, kind: output, shape index: {1}]
  %7 = xla_tuple %s5, %s6
  %s8 = sld [smem:[#allocation0]]
  $region69: #{tpu_custom_call.1} parent=0
    _
  %s10 = ssub.s32 1, %s8
  %s11 = scalar_select 0, %s10, %s8
  $region1: #{tpu_custom_call.1} parent=0
    #allocation2 [shape = 'u8[8192]{0}', space=vmem, size = 0x2000, scoped, tag = 'input window, operand 0']
    #allocation3 [shape = 's32[2]{0}', space=sflag, size = 0x8, scoped, tag = 'scoped memory for tpu_custom_call.1']
    #allocation4 [shape = 's32[2]{0}', space=sflag, size = 0x8, scoped, tag = 'scoped memory for tpu_custom_call.1']
    #allocation5 [shape = 'u8[8192]{0}', space=vmem, size = 0x2000, scoped, tag = 'input window, operand 3, single buffered']
    #allocation6 [shape = 's32[1]{0}', space=sflag, size = 0x4, scoped, tag = 'scoped memory for tpu_custom_call.1']
    #allocation7 [shape = 'u8[8192]{0}', space=vmem, size = 0x2000, scoped, tag = 'output window, operand 0']
    #allocation8 [shape = 'u8[4096]{0}', space=vmem, size = 0x1000, scoped, tag = 'output window, operand 1']
    #allocation9 [shape = 's32[2]{0}', space=sflag, size = 0x8, scoped, tag = 'scoped memory for tpu_custom_call.1']
    %12 = vsyncpa [#allocation3], 0
    %s13 = scalar_lea.sflag [#allocation3], 1
    %14 = vsyncpa %s13, 0
    %15 = vsyncpa [#allocation6], 0
    %16 = vsyncpa [#allocation4], 0
    %s17 = scalar_lea.sflag [#allocation4], 1
    %18 = vsyncpa %s17, 0
    %19 = vsyncpa [#allocation9], 0
    %s20 = scalar_lea.sflag [#allocation9], 1
    %21 = vsyncpa %s20, 0
    loop: start=0, step=1, limit=4
    $region2: #{tpu_custom_call.1} parent=1 // loop_pre_header
      _
    $region3: #{tpu_custom_call.1} parent=1 // loop_header
      %s23 = sphi 0, %s27
      %p24 = scmp.ge.s32.totalorder %s23, 4
      %s33 = sphi 0, %s35
      %s36 = sphi 0, %s33
      %s37 = sphi 0, %s36
      %s53 = sphi 0, %s37
      %s57 = sphi 0, %s57
      %s59 = sphi 0, %s57
      %s60 = sphi 0, %s59
      %s74 = sphi 0, %s60
      %s78 = sphi 0, %s78
      %s80 = sphi 0, %s78
      %s81 = sphi 0, %s80
      %s95 = sphi 0, %s81
      %s99 = sphi 0, %s99
      %s101 = sphi 0, %s99
      %s102 = sphi 0, %s101
      %s116 = sphi 0, %s102
      %s120 = sphi 0, %s120
      %s122 = sphi 0, %s120
      %s123 = sphi 0, %s122
      %s137 = sphi 0, %s123
      %s143 = sphi 0, %s145
      %s146 = sphi 0, %s143
      %s147 = sphi 0, %s146
      %s163 = sphi 0, %s147
      %s169 = sphi 0, %s171
      %s172 = sphi 0, %s169
      %s173 = sphi 0, %s172
      %s189 = sphi 0, %s173
    $region4: #{tpu_custom_call.1} parent=1 // loop_header_branch
      %26 = sbr.rel (%p24) target = $region8
    $region5: #{tpu_custom_call.1} parent=1 // loop_body
      %s28 = ssub.s32 %s23, 1
      %s29 = ssub.s32 %s23, 2
      %s30 = sadd.s32 %s23, 1
      %s31 = ssub.s32 %s23, %s30
      %p32 = scmp.eq.s32.totalorder %s31, 0
      %s34 = sadd.s32 %s33, 1
      %s35 = scalar_select %p32, %s33, %s34
      %p38 = pneg %p32
      %p39 = scmp.eq.s32.totalorder %s23, 1
      %p40 = por %p38, %p39
      %p41 = scmp.ne.s32.totalorder %s33, %s36
      %p42 = scmp.eq.s32.totalorder %s23, 0
      %p43 = por %p41, %p42
      %p44 = scmp.ne.s32.totalorder %s33, %s36
      %p45 = scmp.eq.s32.totalorder %s28, 1
      %p46 = por %p44, %p45
      %p47 = scmp.ne.s32.totalorder %s36, %s37
      %p48 = scmp.eq.s32.totalorder %s28, 0
      %p49 = por %p47, %p48
      %p50 = scmp.ne.s32.totalorder %s36, %s37
      %p51 = scmp.eq.s32.totalorder %s29, 1
      %p52 = por %p50, %p51
      %p54 = scmp.ne.s32.totalorder %s37, %s53
      %p55 = scmp.eq.s32.totalorder %s29, 0
      %p56 = por %p54, %p55
      %s58 = sadd.s32 %s57, 1
      %p61 = scmp.eq.s32.totalorder %s23, 1
      %p62 = scmp.ne.s32.totalorder %s57, %s59
      %p63 = scmp.eq.s32.totalorder %s23, 0
      %p64 = por %p62, %p63
      %p65 = scmp.ne.s32.totalorder %s57, %s59
      %p66 = scmp.eq.s32.totalorder %s28, 1
      %p67 = por %p65, %p66
      %p68 = scmp.ne.s32.totalorder %s59, %s60
      %p69 = scmp.eq.s32.totalorder %s28, 0
      %p70 = por %p68, %p69
      %p71 = scmp.ne.s32.totalorder %s59, %s60
      %p72 = scmp.eq.s32.totalorder %s29, 1
      %p73 = por %p71, %p72
      %p75 = scmp.ne.s32.totalorder %s60, %s74
      %p76 = scmp.eq.s32.totalorder %s29, 0
      %p77 = por %p75, %p76
      %s79 = sadd.s32 %s78, 1
      %p82 = scmp.eq.s32.totalorder %s23, 1
      %p83 = scmp.ne.s32.totalorder %s78, %s80
      %p84 = scmp.eq.s32.totalorder %s23, 0
      %p85 = por %p83, %p84
      %p86 = scmp.ne.s32.totalorder %s78, %s80
      %p87 = scmp.eq.s32.totalorder %s28, 1
      %p88 = por %p86, %p87
      %p89 = scmp.ne.s32.totalorder %s80, %s81
      %p90 = scmp.eq.s32.totalorder %s28, 0
      %p91 = por %p89, %p90
      %p92 = scmp.ne.s32.totalorder %s80, %s81
      %p93 = scmp.eq.s32.totalorder %s29, 1
      %p94 = por %p92, %p93
      %p96 = scmp.ne.s32.totalorder %s81, %s95
      %p97 = scmp.eq.s32.totalorder %s29, 0
      %p98 = por %p96, %p97
      %s100 = sadd.s32 %s99, 1
      %p103 = scmp.eq.s32.totalorder %s23, 1
      %p104 = scmp.ne.s32.totalorder %s99, %s101
      %p105 = scmp.eq.s32.totalorder %s23, 0
      %p106 = por %p104, %p105
      %p107 = scmp.ne.s32.totalorder %s99, %s101
      %p108 = scmp.eq.s32.totalorder %s28, 1
      %p109 = por %p107, %p108
      %p110 = scmp.ne.s32.totalorder %s101, %s102
      %p111 = scmp.eq.s32.totalorder %s28, 0
      %p112 = por %p110, %p111
      %p113 = scmp.ne.s32.totalorder %s101, %s102
      %p114 = scmp.eq.s32.totalorder %s29, 1
      %p115 = por %p113, %p114
      %p117 = scmp.ne.s32.totalorder %s102, %s116
      %p118 = scmp.eq.s32.totalorder %s29, 0
      %p119 = por %p117, %p118
      %s121 = sadd.s32 %s120, 1
      %p124 = scmp.eq.s32.totalorder %s23, 1
      %p125 = scmp.ne.s32.totalorder %s120, %s122
      %p126 = scmp.eq.s32.totalorder %s23, 0
      %p127 = por %p125, %p126
      %p128 = scmp.ne.s32.totalorder %s120, %s122
      %p129 = scmp.eq.s32.totalorder %s28, 1
      %p130 = por %p128, %p129
      %p131 = scmp.ne.s32.totalorder %s122, %s123
      %p132 = scmp.eq.s32.totalorder %s28, 0
      %p133 = por %p131, %p132
      %p134 = scmp.ne.s32.totalorder %s122, %s123
      %p135 = scmp.eq.s32.totalorder %s29, 1
      %p136 = por %p134, %p135
      %p138 = scmp.ne.s32.totalorder %s123, %s137
      %p139 = scmp.eq.s32.totalorder %s29, 0
      %p140 = por %p138, %p139
      %s141 = ssub.s32 %s23, %s30
      %p142 = scmp.eq.s32.totalorder %s141, 0
      %s144 = sadd.s32 %s143, 1
      %s145 = scalar_select %p142, %s143, %s144
      %p148 = pneg %p142
      %p149 = scmp.eq.s32.totalorder %s23, 1
      %p150 = por %p148, %p149
      %p151 = scmp.ne.s32.totalorder %s143, %s146
      %p152 = scmp.eq.s32.totalorder %s23, 0
      %p153 = por %p151, %p152
      %p154 = scmp.ne.s32.totalorder %s143, %s146
      %p155 = scmp.eq.s32.totalorder %s28, 1
      %p156 = por %p154, %p155
      %p157 = scmp.ne.s32.totalorder %s146, %s147
      %p158 = scmp.eq.s32.totalorder %s28, 0
      %p159 = por %p157, %p158
      %p160 = scmp.ne.s32.totalorder %s146, %s147
      %p161 = scmp.eq.s32.totalorder %s29, 1
      %p162 = por %p160, %p161
      %p164 = scmp.ne.s32.totalorder %s147, %s163
      %p165 = scmp.eq.s32.totalorder %s29, 0
      %p166 = por %p164, %p165
      %s167 = ssub.s32 %s23, %s30
      %p168 = scmp.eq.s32.totalorder %s167, 0
      %s170 = sadd.s32 %s169, 1
      %s171 = scalar_select %p168, %s169, %s170
      %p174 = pneg %p168
      %p175 = scmp.eq.s32.totalorder %s23, 1
      %p176 = por %p174, %p175
      %p177 = scmp.ne.s32.totalorder %s169, %s172
      %p178 = scmp.eq.s32.totalorder %s23, 0
      %p179 = por %p177, %p178
      %p180 = scmp.ne.s32.totalorder %s169, %s172
      %p181 = scmp.eq.s32.totalorder %s28, 1
      %p182 = por %p180, %p181
      %p183 = scmp.ne.s32.totalorder %s172, %s173
      %p184 = scmp.eq.s32.totalorder %s28, 0
      %p185 = por %p183, %p184
      %p186 = scmp.ne.s32.totalorder %s172, %s173
      %p187 = scmp.eq.s32.totalorder %s29, 1
      %p188 = por %p186, %p187
      %p190 = scmp.ne.s32.totalorder %s173, %s189
      %p191 = scmp.eq.s32.totalorder %s29, 0
      %p192 = por %p190, %p191
      %p193 = scmp.le.s32.totalorder 1, %s23
      %p194 = scmp.lt.s32.totalorder %s23, 3
      %p195 = pnand %p193, %p194
      %p196 = pneg %p195
      // Predicated region
      $region9: #{tpu_custom_call.1} parent=5 // pred_check
        _
      $region10: #{tpu_custom_call.1} parent=5 // pred_check_branch
        %198 = sbr.rel (%p195) target = $region12
      $region11: #{tpu_custom_call.1} parent=5 // pred_region
        %s199 = ssub.s32 %s23, 1
        // Predicated region
        $region13: #{tpu_custom_call.1} parent=11 // pred_check
          %p200 = pneg %p70
        $region14: #{tpu_custom_call.1} parent=11 // pred_check_branch
          %202 = sbr.rel (%p200) target = $region16
        $region15: #{tpu_custom_call.1} parent=11 // pred_region
          _
        $region16: #{tpu_custom_call.1} parent=11 // pred_fallthru
          _
        // Predicated region
        $region17: #{tpu_custom_call.1} parent=11 // pred_check
          %p203 = pneg %p91
        $region18: #{tpu_custom_call.1} parent=11 // pred_check_branch
          %205 = sbr.rel (%p203) target = $region20
        $region19: #{tpu_custom_call.1} parent=11 // pred_region
          _
        $region20: #{tpu_custom_call.1} parent=11 // pred_fallthru
          _
        // Predicated region
        $region21: #{tpu_custom_call.1} parent=11 // pred_check
          %p206 = pneg %p112
        $region22: #{tpu_custom_call.1} parent=11 // pred_check_branch
          %208 = sbr.rel (%p206) target = $region24
        $region23: #{tpu_custom_call.1} parent=11 // pred_region
          %s210 = ssub.s32 256, 256
          %211 = vsyncadd [#allocation6], %s210
          %s212 = sshll.u32 [#allocation5], 4
          %s213 = int_to_ptr.vmem [resolvable:$true] %s212
          %218 = dma.hbm_to_vmem [thread:$0]  %s3, 256, %s213, [#allocation6], 64, 64, 4
        $region24: #{tpu_custom_call.1} parent=11 // pred_fallthru
          _
        // Predicated region
        $region25: #{tpu_custom_call.1} parent=11 // pred_check
          %p219 = pneg %p133
        $region26: #{tpu_custom_call.1} parent=11 // pred_check_branch
          %221 = sbr.rel (%p219) target = $region28
        $region27: #{tpu_custom_call.1} parent=11 // pred_region
          _
        $region28: #{tpu_custom_call.1} parent=11 // pred_fallthru
          _
      $region12: #{tpu_custom_call.1} parent=5 // pred_fallthru
        _
      %p222 = scmp.lt.s32.totalorder %s23, 2
      // Predicated region
      $region29: #{tpu_custom_call.1} parent=5 // pred_check
        %p223 = pneg %p222
      $region30: #{tpu_custom_call.1} parent=5 // pred_check_branch
        %225 = sbr.rel (%p223) target = $region32
      $region31: #{tpu_custom_call.1} parent=5 // pred_region
        // Predicated region
        $region33: #{tpu_custom_call.1} parent=31 // pred_check
          %p226 = pneg %p43
        $region34: #{tpu_custom_call.1} parent=31 // pred_check_branch
          %228 = sbr.rel (%p226) target = $region36
        $region35: #{tpu_custom_call.1} parent=31 // pred_region
          %s229 = sand.u32 %s33, 1
          %s230 = scalar_lea.sflag [#allocation3], %s229
          %s231 = sand.u32 %s33, 1
          %s232 = smul.addr %s231, 8
          %s233 = scalar_lea.vmem [#allocation2], %s232
          %s235 = ssub.s32 128, 128
          %236 = vsyncadd %s230, %s235
          %s237 = smul.addr %s23, 128
          %s238 = scalar_lea.hbm %s0, %s237
          %s240 = sshll.u32 %s233, 4
          %s241 = int_to_ptr.vmem [resolvable:$true] %s240
          %243 = dma.hbm_to_vmem [thread:$0]  %s238, 128, %s241, %s230
        $region36: #{tpu_custom_call.1} parent=31 // pred_fallthru
          _
      $region32: #{tpu_custom_call.1} parent=5 // pred_fallthru
        _
      %p244 = scmp.le.s32.totalorder 1, %s23
      %p245 = scmp.lt.s32.totalorder %s23, 3
      %p246 = pnand %p244, %p245
      %p247 = pneg %p246
      // Predicated region
      $region37: #{tpu_custom_call.1} parent=5 // pred_check
        _
      $region38: #{tpu_custom_call.1} parent=5 // pred_check_branch
        %249 = sbr.rel (%p246) target = $region40
      $region39: #{tpu_custom_call.1} parent=5 // pred_region
        %s250 = ssub.s32 %s23, 1
        %s251 = sand.u32 %s36, 1
        %s252 = scalar_lea.sflag [#allocation3], %s251
        %s253 = sand.u32 %s36, 1
        %s254 = smul.addr %s253, 8
        %s255 = scalar_lea.vmem [#allocation2], %s254
        // Predicated region
        $region41: #{tpu_custom_call.1} parent=39 // pred_check
          %p256 = pneg %p49
        $region42: #{tpu_custom_call.1} parent=39 // pred_check_branch
          %258 = sbr.rel (%p256) target = $region44
        $region43: #{tpu_custom_call.1} parent=39 // pred_region
          %259 = dma.done %s252, 128
        $region44: #{tpu_custom_call.1} parent=39 // pred_fallthru
          _
        // Predicated region
        $region45: #{tpu_custom_call.1} parent=39 // pred_check
          %p260 = pneg %p112
        $region46: #{tpu_custom_call.1} parent=39 // pred_check_branch
          %262 = sbr.rel (%p260) target = $region48
        $region47: #{tpu_custom_call.1} parent=39 // pred_region
          %263 = dma.done [#allocation6], 256
        $region48: #{tpu_custom_call.1} parent=39 // pred_fallthru
          _
        %s264 = sand.u32 %s36, 1
        %s265 = scalar_lea.sflag [#allocation3], %s264
        %s266 = sand.u32 %s36, 1
        %s267 = smul.addr %s266, 8
        %s268 = scalar_lea.vmem [#allocation2], %s267
        %p269 = pneg %p49
        %p270 = pneg %p46
        %p271 = pneg %p70
        %p272 = pneg %p67
        %p273 = pneg %p91
        %p274 = pneg %p88
        %p275 = pneg %p112
        %p276 = pneg %p109
        %p277 = pneg %p133
        %p278 = pneg %p130
        %p279 = pneg %p159
        %p280 = pneg %p156
        %s281 = sand.u32 %s146, 1
        %s282 = scalar_lea.sflag [#allocation4], %s281
        %s283 = sand.u32 %s146, 1
        %s284 = smul.addr %s283, 8
        %s285 = scalar_lea.vmem [#allocation7], %s284
        %p286 = pneg %p185
        %p287 = pneg %p182
        %s288 = sand.u32 %s172, 1
        %s289 = scalar_lea.sflag [#allocation9], %s288
        %s290 = sand.u32 %s172, 1
        %s291 = smul.addr %s290, 4
        %s292 = scalar_lea.vmem [#allocation8], %s291
        %v294 = vld [vmem:[%s255] sm:$0xff]
        %v295 = vld [vmem:[%s1] sm:$0x1]
        %v296 = vld [vmem:[%s2] sm:$0x1]
        %vm297 = vcmask 261120
        %v298 = vsel %vm297, %v294, 0.0
        %299 = vadd.xlane.f32.xlu0 %v298
        %v300 = vpop.xlane.xlu0 %299
        %v301 = vrcp.pop 32.0
        %v302 = vmul.f32 %v300, %v301
        %v303 = vsub.f32 %v294, %v302
        %v304 = vmul.f32 %v303, %v303
        %v305 = vsel %vm297, %v304, 0.0
        %306 = vadd.xlane.f32.xlu0 %v305
        %v307 = vpop.xlane.xlu0 %306
        %v308 = vmul.f32 %v307, %v301
        %v309 = vadd.f32 %v308, 1e-12
        %v310 = vrsqrt.pop %v309
        %v311 = vmul.f32 %v303, %v310
        %v313 = vlaneseq
        %v314 = vshrl.u32 %v313, 7
        %v315 = vsub.s32 0, %v314
        %v316 = vrot.slane %v295, %v315
        %v318 = vmul.f32 %v311, %v316
        %v320 = vlaneseq
        %v321 = vshrl.u32 %v320, 7
        %v322 = vsub.s32 0, %v321
        %v323 = vrot.slane %v296, %v322
        %v325 = vadd.f32 %v318, %v323
        %326 = vst.msk [vmem:[%s285] sm:$0xff] %vm297, %v325
        %v327 = vpack.c.bf16 %v325, %v325
        %v328 = vld [vmem:[#allocation5] sm:$0xf]
        %v329 = vld [vmem:[#allocation5 + $0x4] sm:$0xf]
        %v330 = vld [vmem:[#allocation5 + $0x8] sm:$0xf]
        %v331 = vld [vmem:[#allocation5 + $0xc] sm:$0xf]
        %v332 = vld [vmem:[%s4] sm:$0x1]
        %v334 = vlaneseq
        %v335 = vshrl.u32 %v334, 7
        %v336 = vsub.s32 0, %v335
        %v337 = vrot.slane %v332, %v336
        %v343 = vunpack.c.l.b16 %v328
        %v344 = vunpack.c.l.b16 %v329
        %v345 = vunpack.c.l.b16 %v330
        %v346 = vunpack.c.l.b16 %v331
        %v347 = vpack.c.b16 %v344, %v343
        %v348 = vpack.c.b16 %v346, %v345
        %v352 = vsel %vm297, %v327, 0
        %354 = vmatprep.subr.bf16.mxu0 0
        %355 = vmatpush1.bf16.msra.mxu0 %v347
        %356 = vmatprep.subr.bf16.mxu0 0
        %357 = vmatpush1.bf16.msra.mxu0 %v348
        %358 = vmatprep.subr.bf16.mxu0 0
        %359 = vmatpush1.bf16.msra.mxu0 0
        %360 = vmatprep.subr.bf16.mxu0 0
        %361 = vmatpush1.bf16.msra.mxu0 0
        %362 = vmatprep.subr.bf16.mxu0 0
        %363 = vmatpush1.bf16.msra.mxu0 0
        %364 = vmatprep.subr.bf16.mxu0 0
        %365 = vmatpush1.bf16.msra.mxu0 0
        %366 = vmatprep.subr.bf16.mxu0 0
        %367 = vmatpush1.bf16.msra.mxu0 0
        %368 = vmatprep.subr.bf16.mxu0 0
        %369 = vmatpush1.bf16.msra.mxu0 0
        %370 = vmatprep.subr.bf16.mxu0 0
        %371 = vmatpush1.bf16.msra.mxu0 0
        %372 = vmatprep.subr.bf16.mxu0 0
        %373 = vmatpush1.bf16.msra.mxu0 0
        %374 = vmatprep.subr.bf16.mxu0 0
        %375 = vmatpush1.bf16.msra.mxu0 0
        %376 = vmatprep.subr.bf16.mxu0 0
        %377 = vmatpush1.bf16.msra.mxu0 0
        %378 = vmatprep.subr.bf16.mxu0 0
        %379 = vmatpush1.bf16.msra.mxu0 0
        %380 = vmatprep.subr.bf16.mxu0 0
        %381 = vmatpush1.bf16.msra.mxu0 0
        %382 = vmatprep.subr.bf16.mxu0 0
        %383 = vmatpush1.bf16.msra.mxu0 0
        %384 = vmatprep.subr.bf16.mxu0 0
        %385 = vmatpush1.bf16.msra.mxu0 0
        %386 = vmatprep.mubr.bf16.mxu0 0
        %387 = vmatmul.mubr.bf16.gmra.mrb[0].mxu0 %v352
        %v388 = vpop.f32.mrb[0].mxu0
        %v389 = vadd.f32 %v337, %v388
        %v390 = vpop.f32.mrb[0].mxu0
        %v391 = vpop.f32.mrb[0].mxu0
        %v392 = vpop.f32.mrb[0].mxu0
        %393 = vdwg.mxu0
        %v394 = vpack.c.bf16 %v389, %v389
        %vm395 = vcmask 781312
        %396 = vst.msk [vmem:[%s292] sm:$0xf] %vm395, %v394
        %s397 = sand.u32 %s146, 1
        %s398 = scalar_lea.sflag [#allocation4], %s397
        %s399 = sand.u32 %s146, 1
        %s400 = smul.addr %s399, 8
        %s401 = scalar_lea.vmem [#allocation7], %s400
        %s402 = sand.u32 %s172, 1
        %s403 = scalar_lea.sflag [#allocation9], %s402
        %s404 = sand.u32 %s172, 1
        %s405 = smul.addr %s404, 4
        %s406 = scalar_lea.vmem [#allocation8], %s405
        // Predicated region
        $region49: #{tpu_custom_call.1} parent=39 // pred_check
          %p407 = pneg %p156
        $region50: #{tpu_custom_call.1} parent=39 // pred_check_branch
          %409 = sbr.rel (%p407) target = $region52
        $region51: #{tpu_custom_call.1} parent=39 // pred_region
          %s411 = ssub.s32 128, 128
          %412 = vsyncadd %s398, %s411
          %s413 = smul.addr %s28, 128
          %s414 = scalar_lea.hbm %s5, %s413
          %s416 = sshll.u32 %s401, 4
          %s417 = int_to_ptr.vmem [resolvable:$true] %s416
          %419 = dma.vmem_to_hbm [thread:$0]  %s417, 128, %s414, %s398
        $region52: #{tpu_custom_call.1} parent=39 // pred_fallthru
          _
        // Predicated region
        $region53: #{tpu_custom_call.1} parent=39 // pred_check
          %p420 = pneg %p182
        $region54: #{tpu_custom_call.1} parent=39 // pred_check_branch
          %422 = sbr.rel (%p420) target = $region56
        $region55: #{tpu_custom_call.1} parent=39 // pred_region
          %s424 = ssub.s32 64, 64
          %425 = vsyncadd %s403, %s424
          %s426 = smul.addr %s28, 64
          %s427 = scalar_lea.hbm %s6, %s426
          %s429 = sshll.u32 %s406, 4
          %s430 = int_to_ptr.vmem [resolvable:$true] %s429
          %432 = dma.vmem_to_hbm [thread:$0]  %s430, 64, %s427, %s403
        $region56: #{tpu_custom_call.1} parent=39 // pred_fallthru
          _
      $region40: #{tpu_custom_call.1} parent=5 // pred_fallthru
        _
      %p433 = scmp.le.s32.totalorder 2, %s23
      // Predicated region
      $region57: #{tpu_custom_call.1} parent=5 // pred_check
        %p434 = pneg %p433
      $region58: #{tpu_custom_call.1} parent=5 // pred_check_branch
        %436 = sbr.rel (%p434) target = $region60
      $region59: #{tpu_custom_call.1} parent=5 // pred_region
        %s437 = ssub.s32 %s23, 2
        // Predicated region
        $region61: #{tpu_custom_call.1} parent=59 // pred_check
          %p438 = pneg %p162
        $region62: #{tpu_custom_call.1} parent=59 // pred_check_branch
          %440 = sbr.rel (%p438) target = $region64
        $region63: #{tpu_custom_call.1} parent=59 // pred_region
          %s441 = sand.u32 %s147, 1
          %s442 = scalar_lea.sflag [#allocation4], %s441
          %s443 = sand.u32 %s147, 1
          %s444 = smul.addr %s443, 8
          %s445 = scalar_lea.vmem [#allocation7], %s444
          %446 = dma.done %s442, 128
        $region64: #{tpu_custom_call.1} parent=59 // pred_fallthru
          _
        // Predicated region
        $region65: #{tpu_custom_call.1} parent=59 // pred_check
          %p447 = pneg %p188
        $region66: #{tpu_custom_call.1} parent=59 // pred_check_branch
          %449 = sbr.rel (%p447) target = $region68
        $region67: #{tpu_custom_call.1} parent=59 // pred_region
          %s450 = sand.u32 %s173, 1
          %s451 = scalar_lea.sflag [#allocation9], %s450
          %s452 = sand.u32 %s173, 1
          %s453 = smul.addr %s452, 4
          %s454 = scalar_lea.vmem [#allocation8], %s453
          %455 = dma.done %s451, 64
        $region68: #{tpu_custom_call.1} parent=59 // pred_fallthru
          _
      $region60: #{tpu_custom_call.1} parent=5 // pred_fallthru
        _
    $region6: #{tpu_custom_call.1} parent=1 // loop_footer
      %s27 = sadd.s32 1, %s23
    $region7: #{tpu_custom_call.1} parent=1 // loop_footer_branch
      %22 = sbr.rel target = $region3
    $region8: #{tpu_custom_call.1} parent=1 // loop_exit
      _
    %456 = vsyncpa [#allocation3], 1
    %s457 = scalar_lea.sflag [#allocation3], 1
    %458 = vsyncpa %s457, 1
    %459 = vsyncpa [#allocation6], 1
    %460 = vsyncpa [#allocation4], 1
    %s461 = scalar_lea.sflag [#allocation4], 1
    %462 = vsyncpa %s461, 1
    %463 = vsyncpa [#allocation9], 1
    %s464 = scalar_lea.sflag [#allocation9], 1
    %465 = vsyncpa %s464, 1

</llo_original>
